<compile_context>
chip_gen: v5e
topology: v5e:2x2
jax: 0.10.0
libtpu: 0.0.40
codegen_flags: <defaults>
</compile_context>

<pallas_src>
import numpy as np
import jax
import jax.numpy as jnp
from jax.experimental import pallas as pl
from jax.experimental.pallas import tpu as pltpu


# ----------------------------------------------------------------------------
# Band-matrix construction (wrapper-side, one-time).
#
# A 3x3 SAME conv on a lane-flat row (length W*Cin) is a matmul against a
# block-banded matrix B[dy] of shape (W*Cin, W*Cout):
#   B[dy, s*Cin + ci, w*Cout + co] = w9[3*dy + dx, ci, co]   with s = w + dx - 1
# Rows that would reference out-of-range input columns are simply absent
# (zero), which implements the zero padding along W with no stored halo.
# ----------------------------------------------------------------------------
def build_band_weights(w9, W, dtype=jnp.float32):
    _, Cin, Cout = w9.shape
    sel = np.zeros((3, W, W), np.float32)           # sel[dx, s, w] = [s == w+dx-1]
    for dx in range(3):
        for w in range(W):
            s = w + dx - 1
            if 0 <= s < W:
                sel[dx, s, w] = 1.0
    w33 = w9.reshape(3, 3, Cin, Cout)
    band = jnp.einsum('xsw,yxco->yscwo', jnp.asarray(sel), w33)   # (3,W,Cin,W,Cout)
    return band.reshape(3, W * Cin, W * Cout).astype(dtype)


# ----------------------------------------------------------------------------
# Pallas kernel 1: 3x3 "same" conv + bias on lane-flat activations, used for
# the (one-time) injection path.  The row halo is built in a VMEM scratch, so
# no padded copy of the input is ever materialised in HBM.
# ----------------------------------------------------------------------------
def _conv3x3_band_kernel(x_ref, w_ref, b_ref, o_ref, pad_scr):
    # x_ref: (N, H, W*Cin)   w_ref: (3, W*Cin, W*Cout)   b_ref: (1, W*Cout)
    # o_ref: (N, H, W*Cout)  pad_scr: (N, H+2, W*Cin) f32 scratch (row halo)
    N, H, WCin = x_ref.shape
    WCout = o_ref.shape[-1]

    pad_scr[...] = jnp.zeros_like(pad_scr)
    pad_scr[:, 1:1 + H, :] = x_ref[...]

    acc = None
    for dy in range(3):                         # 3 banded matmuls, K = W*Cin
        lhs = pad_scr[:, dy:dy + H, :].reshape(N * H, WCin).astype(w_ref.dtype)
        part = jnp.dot(lhs, w_ref[dy], preferred_element_type=jnp.float32)
        acc = part if acc is None else acc + part

    o_ref[...] = (acc + b_ref[...]).reshape(N, H, WCout)


def conv3x3_band(x_flat, w_band, bias_flat):
    """3x3 SAME conv + bias: (N, H, W*Cin) -> (N, H, W*Cout), lane-flat."""
    N, H, WCin = x_flat.shape
    WCout = w_band.shape[-1]
    return pl.pallas_call(
        _conv3x3_band_kernel,
        out_shape=jax.ShapeDtypeStruct((N, H, WCout), jnp.float32),
        in_specs=[pl.BlockSpec(memory_space=pltpu.MemorySpace.VMEM)] * 3,
        out_specs=pl.BlockSpec(memory_space=pltpu.MemorySpace.VMEM),
        scratch_shapes=[pltpu.VMEM((N, H + 2, WCin), jnp.float32)],
        compiler_params=pltpu.CompilerParams(vmem_limit_bytes=32 * 1024 * 1024),
    )(x_flat, w_band, bias_flat.reshape(1, WCout))


# ----------------------------------------------------------------------------
# Pallas kernel 2: the DEQ fixed-point iteration (the hot path).
# One grid step per image.  z is kept lane-flat bf16 (H+2, W*C) in VMEM
# scratch (rows 0 and H+1 are the zero row-halo); each step:
#   z <- relu( conv3x3(z) + b + x )   for every scale,
# where the conv is 3 banded bf16 matmuls (K = W*C) per scale, every tap
# operand is a contiguous 2-D slice of the scratch, and (x + b) is precomputed
# outside the loop in f32.
# ----------------------------------------------------------------------------
def _make_deq_kernel(n_steps, unroll):
    def kernel(xb0_ref, xb1_ref, w0_ref, w1_ref, o0_ref, o1_ref, z0, z1):
        H0, WC0 = xb0_ref.shape          # batch dim squeezed by BlockSpec
        H1, WC1 = xb1_ref.shape

        # init_z_list: zeros (the row halo stays zero for the whole solve)
        z0[...] = jnp.zeros_like(z0)
        z1[...] = jnp.zeros_like(z1)

        def body(step, carry):
            # loop-invariant (x + b), precomputed in the wrapper (f32)
            a0 = xb0_ref[...]                      # (H0, WC0) f32
            a1 = xb1_ref[...]                      # (H1, WC1) f32
            # 3 banded bf16 matmuls per scale; contiguous 2-D operands, no
            # reshape/cast in the loop; the two scales are interleaved so the
            # MXU stays fed while the other scale's result path drains.
            for dy in range(3):
                a0 = a0 + jnp.dot(z0[dy:dy + H0, :], w0_ref[dy],
                                  preferred_element_type=jnp.float32)
                a1 = a1 + jnp.dot(z1[dy:dy + H1, :], w1_ref[dy],
                                  preferred_element_type=jnp.float32)
            # relu in f32, store z as bf16 (identical dot numerics; half the
            # bytes loaded next iteration).
            z0[1:1 + H0, :] = jnp.maximum(a0, 0.0).astype(jnp.bfloat16)
            z1[1:1 + H1, :] = jnp.maximum(a1, 0.0).astype(jnp.bfloat16)
            return carry

        jax.lax.fori_loop(0, n_steps, body, 0, unroll=unroll)

        o0_ref[...] = z0[1:1 + H0, :].astype(jnp.float32)
        o1_ref[...] = z1[1:1 + H1, :].astype(jnp.float32)

    return kernel


def deq_fixed_point(xb0, xb1, w0_band, w1_band, n_steps, unroll=2):
    N, H0, WC0 = xb0.shape
    _, H1, WC1 = xb1.shape

    # Advisory cost hint for XLA's scheduler around the long-running call.
    flops = 2 * n_steps * N * 3 * (H0 * WC0 * WC0 + H1 * WC1 * WC1)
    bytes_accessed = (2 * 4 * (N * H0 * WC0 + N * H1 * WC1)       # f32 in + out
                      + 2 * 3 * (WC0 * WC0 + WC1 * WC1))          # bf16 weights
    ce = pl.CostEstimate(flops=flops, transcendentals=0,
                         bytes_accessed=bytes_accessed)

    grid_spec = pltpu.PrefetchScalarGridSpec(
        num_scalar_prefetch=0,
        grid=(N,),                                  # one image per grid step
        in_specs=[
            pl.BlockSpec((None, H0, WC0), lambda b: (b, 0, 0)),
            pl.BlockSpec((None, H1, WC1), lambda b: (b, 0, 0)),
            pl.BlockSpec((3, WC0, WC0), lambda b: (0, 0, 0)),   # resident weights
            pl.BlockSpec((3, WC1, WC1), lambda b: (0, 0, 0)),
        ],
        out_specs=[
            pl.BlockSpec((None, H0, WC0), lambda b: (b, 0, 0)),
            pl.BlockSpec((None, H1, WC1), lambda b: (b, 0, 0)),
        ],
        scratch_shapes=[
            pltpu.VMEM((H0 + 2, WC0), jnp.bfloat16),   # z0 with zero row-halo
            pltpu.VMEM((H1 + 2, WC1), jnp.bfloat16),   # z1 with zero row-halo
        ],
    )

    return pl.pallas_call(
        _make_deq_kernel(n_steps, unroll),
        out_shape=(jax.ShapeDtypeStruct((N, H0, WC0), jnp.float32),
                   jax.ShapeDtypeStruct((N, H1, WC1), jnp.float32)),
        grid_spec=grid_spec,
        cost_estimate=ce,
        compiler_params=pltpu.CompilerParams(
            dimension_semantics=("parallel",),        # batch-parallel (2 TCs on v7x)
            vmem_limit_bytes=32 * 1024 * 1024),
    )(xb0, xb1, w0_band, w1_band)


# ----------------------------------------------------------------------------
# Backbone wrapper (mirrors MDEQModelBackbone.forward / parse_cfg)
# ----------------------------------------------------------------------------
class MDEQModelBackbonePallas:
    def __init__(self, cfg, params):
        # parse_cfg
        self.num_layers = cfg.get('num_layers', 2)
        self.f_thres = cfg.get('f_thres', 24)
        self.b_thres = cfg.get('b_thres', 24)
        self.pretrain_steps = cfg.get('pretrain_steps', 0)
        self.params = params
        self._band_cache = {}
        # Note: self.f_copy / load_state_dict in the PyTorch module only serves
        # the custom backward pass; forward numerics are weight-tied and
        # identical, so no copy is needed here.

    def _band(self, name, W, dtype):
        key = (name, W, str(dtype))
        if key not in self._band_cache:
            self._band_cache[key] = build_band_weights(self.params[name], W, dtype)
        return self._band_cache[key]

    def inject(self, x_nchw):
        # ModelInjection: single input -> per-scale injections (lane-flat, f32).
        p = self.params
        x = jnp.transpose(x_nchw, (0, 2, 3, 1))            # NCHW -> NHWC
        N, H, W, Cin = x.shape
        C = p['w_inj0'].shape[-1]
        x0 = conv3x3_band(x.reshape(N, H, W * Cin),
                          self._band('w_inj0', W, jnp.float32),
                          jnp.tile(p['b_inj0'], W))         # (N, H, W*C)
        # TODO(synk): 2x2 avg-pool glue between scales stays in XLA (one-time op).
        xd = x0.reshape(N, H, W, C) \
               .reshape(N, H // 2, 2, W // 2, 2, C).mean(axis=(2, 4))
        x1 = conv3x3_band(xd.reshape(N, H // 2, (W // 2) * C),
                          self._band('w_inj1', W // 2, jnp.float32),
                          jnp.tile(p['b_inj1'], W // 2))    # (N, H/2, (W/2)*C)
        return [x0, x1]

    def forward(self, x, train_step=-1, **kwargs):
        f_thres = kwargs.get('f_thres', self.f_thres)
        p = self.params
        x_list = self.inject(x)
        if 0 <= train_step < self.pretrain_steps:
            n_steps = self.num_layers        # weight-tied pretrain unrolling
        else:
            # TODO(synk): MDEQWrapper uses a Broyden root solver (not provided);
            # Picard fixed-point iteration for f_thres steps is used instead.
            n_steps = f_thres

        x0, x1 = x_list
        N, H0, WC0 = x0.shape
        _, H1, WC1 = x1.shape
        C = p['w_f0'].shape[-1]
        W0, W1 = WC0 // C, WC1 // C

        # Hoist the loop-invariant (x + b) out of the DEQ iteration (f32).
        xb0 = x0 + jnp.tile(p['b_f0'], W0)                  # (N, H0, WC0)
        xb1 = x1 + jnp.tile(p['b_f1'], W1)                  # (N, H1, WC1)

        z0, z1 = deq_fixed_point(
            xb0, xb1,
            self._band('w_f0', W0, jnp.bfloat16),
            self._band('w_f1', W1, jnp.bfloat16),
            n_steps)

        # Back to NHWC for the caller (free reshape outside the kernel).
        return [z0.reshape(N, H0, W0, C), z1.reshape(N, H1, W1, C)]


# ----------------------------------------------------------------------------
# Pure-JAX reference (for correctness checking)
# ----------------------------------------------------------------------------
def _conv3x3_ref(x, w9, b):
    Cin, Cout = w9.shape[1], w9.shape[2]
    hwio = w9.reshape(3, 3, Cin, Cout)
    y = jax.lax.conv_general_dilated(
        x, hwio, (1, 1), 'SAME',
        dimension_numbers=('NHWC', 'HWIO', 'NHWC'),
        precision=jax.lax.Precision.HIGHEST)
    return y + b


def reference_forward(x_nchw, params, n_steps):
    x = jnp.transpose(x_nchw, (0, 2, 3, 1))
    x0 = _conv3x3_ref(x, params['w_inj0'], params['b_inj0'])
    N, H, W, C = x0.shape
    xd = x0.reshape(N, H // 2, 2, W // 2, 2, C).mean(axis=(2, 4))
    x1 = _conv3x3_ref(xd, params['w_inj1'], params['b_inj1'])
    z0 = jnp.zeros_like(x0)
    z1 = jnp.zeros_like(x1)
    for _ in range(n_steps):
        z0 = jax.nn.relu(_conv3x3_ref(z0, params['w_f0'], params['b_f0']) + x0)
        z1 = jax.nn.relu(_conv3x3_ref(z1, params['w_f1'], params['b_f1']) + x1)
    return [z0, z1]


# ----------------------------------------------------------------------------
if __name__ == "__main__":
    cfg = {'num_layers': 2, 'f_thres': 24, 'b_thres': 24, 'pretrain_steps': 0}
    N, Cin, H, W, C = 2, 4, 16, 16, 32

    key = jax.random.PRNGKey(0)
    ks = jax.random.split(key, 8)
    # Weights stored as (9, Cin, Cout) == nn.Conv2d weight transposed to HWIO
    # and flattened over the 3x3 taps. Deterministic synthetic init.
    params = {
        'w_inj0': 0.30 * jax.random.normal(ks[0], (9, Cin, C), jnp.float32),
        'b_inj0': 0.05 * jax.random.normal(ks[1], (C,), jnp.float32),
        'w_inj1': 0.10 * jax.random.normal(ks[2], (9, C, C), jnp.float32),
        'b_inj1': 0.05 * jax.random.normal(ks[3], (C,), jnp.float32),
        'w_f0':   0.04 * jax.random.normal(ks[4], (9, C, C), jnp.float32),
        'b_f0':   0.02 * jax.random.normal(ks[5], (C,), jnp.float32),
        'w_f1':   0.04 * jax.random.normal(ks[6], (9, C, C), jnp.float32),
        'b_f1':   0.02 * jax.random.normal(ks[7], (C,), jnp.float32),
    }

    # Input in the PyTorch NCHW convention.
    x = jax.random.normal(jax.random.PRNGKey(0), (N, Cin, H, W), jnp.float32)

    model = MDEQModelBackbonePallas(cfg, params)
    z_list = model.forward(x, train_step=-1)
    z_list = jax.block_until_ready(z_list)

    ref = reference_forward(x, params, cfg['f_thres'])
    assert z_list[0].shape == (N, H, W, C)
    assert z_list[1].shape == (N, H // 2, W // 2, C)
    for zk, zr in zip(z_list, ref):
        np.testing.assert_allclose(np.asarray(zk), np.asarray(zr),
                                   rtol=5e-2, atol=5e-2)

    print("KERNEL_OK")
</pallas_src>

<mosaic_0001>
module attributes {stable_mosaic.version = 11 : i64} {
  func.func @_conv3x3_band_kernel(%arg0: memref<2x16x64xf32, #tpu.memory_space<vmem>>, %arg1: memref<3x64x512xf32, #tpu.memory_space<vmem>>, %arg2: memref<1x512xf32, #tpu.memory_space<vmem>>, %arg3: memref<2x16x512xf32, #tpu.memory_space<vmem>>, %arg4: memref<2x18x64xf32, #tpu.memory_space<vmem>>) attributes {dimension_semantics = [], scalar_prefetch = 0 : i64, scratch_operands = 1 : i64, tpu.core_type = #tpu.core_type<tc>} {
    %cst = arith.constant 0.000000e+00 : f32
    %0 = vector.broadcast %cst : f32 to vector<2x18x64xf32>
    %c0 = arith.constant 0 : index
    %c0_0 = arith.constant 0 : index
    %c0_1 = arith.constant 0 : index
    %1 = vector.load %arg4[%c0, %c0_0, %c0_1] : memref<2x18x64xf32, #tpu.memory_space<vmem>>, vector<2x18x64xf32>
    tpu.vector_store %arg4[%c0, %c0_0, %c0_1], %0 {strides = array<i32>} : memref<2x18x64xf32, #tpu.memory_space<vmem>>, vector<2x18x64xf32>,
    %c0_2 = arith.constant 0 : index
    %c0_3 = arith.constant 0 : index
    %c0_4 = arith.constant 0 : index
    %2 = vector.load %arg0[%c0_2, %c0_3, %c0_4] : memref<2x16x64xf32, #tpu.memory_space<vmem>>, vector<2x16x64xf32>
    %c0_5 = arith.constant 0 : index
    %c1 = arith.constant 1 : index
    %c0_6 = arith.constant 0 : index
    %3 = vector.load %arg4[%c0_5, %c1, %c0_6] : memref<2x18x64xf32, #tpu.memory_space<vmem>>, vector<2x16x64xf32>
    tpu.vector_store %arg4[%c0_5, %c1, %c0_6], %2 {strides = array<i32>} : memref<2x18x64xf32, #tpu.memory_space<vmem>>, vector<2x16x64xf32>,
    %c0_7 = arith.constant 0 : index
    %c0_8 = arith.constant 0 : index
    %c0_9 = arith.constant 0 : index
    %4 = vector.load %arg4[%c0_7, %c0_8, %c0_9] : memref<2x18x64xf32, #tpu.memory_space<vmem>>, vector<2x16x64xf32>
    %5 = vector.shape_cast %4 : vector<2x16x64xf32> to vector<32x64xf32>
    %c0_10 = arith.constant 0 : index
    %c0_11 = arith.constant 0 : index
    %c0_12 = arith.constant 0 : index
    %6 = vector.load %arg1[%c0_10, %c0_11, %c0_12] : memref<3x64x512xf32, #tpu.memory_space<vmem>>, vector<1x64x512xf32>
    %7 = vector.shape_cast %6 : vector<1x64x512xf32> to vector<64x512xf32>
    %cst_13 = arith.constant dense<0.000000e+00> : vector<32x512xf32>
    %8 = tpu.matmul %5, %7, %cst_13 {dimension_numbers = #tpu.dot_dimension_numbers<[1], [0], [0], [1], [0, 0, 1, 1], [], []>} : vector<32x64xf32>, vector<64x512xf32>, vector<32x512xf32> -> vector<32x512xf32>
    %c0_14 = arith.constant 0 : index
    %c1_15 = arith.constant 1 : index
    %c0_16 = arith.constant 0 : index
    %9 = vector.load %arg4[%c0_14, %c1_15, %c0_16] : memref<2x18x64xf32, #tpu.memory_space<vmem>>, vector<2x16x64xf32>
    %10 = vector.shape_cast %9 : vector<2x16x64xf32> to vector<32x64xf32>
    %c1_17 = arith.constant 1 : index
    %c0_18 = arith.constant 0 : index
    %c0_19 = arith.constant 0 : index
    %11 = vector.load %arg1[%c1_17, %c0_18, %c0_19] : memref<3x64x512xf32, #tpu.memory_space<vmem>>, vector<1x64x512xf32>
    %12 = vector.shape_cast %11 : vector<1x64x512xf32> to vector<64x512xf32>
    %cst_20 = arith.constant dense<0.000000e+00> : vector<32x512xf32>
    %13 = tpu.matmul %10, %12, %cst_20 {dimension_numbers = #tpu.dot_dimension_numbers<[1], [0], [0], [1], [0, 0, 1, 1], [], []>} : vector<32x64xf32>, vector<64x512xf32>, vector<32x512xf32> -> vector<32x512xf32>
    %14 = arith.addf %8, %13 : vector<32x512xf32>
    %c0_21 = arith.constant 0 : index
    %c2 = arith.constant 2 : index
    %c0_22 = arith.constant 0 : index
    %15 = vector.load %arg4[%c0_21, %c2, %c0_22] : memref<2x18x64xf32, #tpu.memory_space<vmem>>, vector<2x16x64xf32>
    %16 = vector.shape_cast %15 : vector<2x16x64xf32> to vector<32x64xf32>
    %c2_23 = arith.constant 2 : index
    %c0_24 = arith.constant 0 : index
    %c0_25 = arith.constant 0 : index
    %17 = vector.load %arg1[%c2_23, %c0_24, %c0_25] : memref<3x64x512xf32, #tpu.memory_space<vmem>>, vector<1x64x512xf32>
    %18 = vector.shape_cast %17 : vector<1x64x512xf32> to vector<64x512xf32>
    %cst_26 = arith.constant dense<0.000000e+00> : vector<32x512xf32>
    %19 = tpu.matmul %16, %18, %cst_26 {dimension_numbers = #tpu.dot_dimension_numbers<[1], [0], [0], [1], [0, 0, 1, 1], [], []>} : vector<32x64xf32>, vector<64x512xf32>, vector<32x512xf32> -> vector<32x512xf32>
    %20 = arith.addf %14, %19 : vector<32x512xf32>
    %c0_27 = arith.constant 0 : index
    %c0_28 = arith.constant 0 : index
    %21 = vector.load %arg2[%c0_27, %c0_28] : memref<1x512xf32, #tpu.memory_space<vmem>>, vector<1x512xf32>
    %22 = vector.broadcast %21 : vector<1x512xf32> to vector<32x512xf32>
    %23 = arith.addf %20, %22 : vector<32x512xf32>
    %24 = vector.shape_cast %23 : vector<32x512xf32> to vector<2x16x512xf32>
    %c0_29 = arith.constant 0 : index
    %c0_30 = arith.constant 0 : index
    %c0_31 = arith.constant 0 : index
    %25 = vector.load %arg3[%c0_29, %c0_30, %c0_31] : memref<2x16x512xf32, #tpu.memory_space<vmem>>, vector<2x16x512xf32>
    tpu.vector_store %arg3[%c0_29, %c0_30, %c0_31], %24 {strides = array<i32>} : memref<2x16x512xf32, #tpu.memory_space<vmem>>, vector<2x16x512xf32>,
    return
  }
}

</mosaic_0001>

<llo_original>
// kernel: tpu_custom_call.1
$region0: #{tpu_custom_call.1}
  #allocation0 [shape = 'u32[]', space=smem, size = 0x4, offset = 0x4, fixed_abs, tag = 'smem constant byte address 0x4 - core index']
  #allocation1 [shape = 'u32[72,128]{1,0:T(1,128)}', space=vmem, size = 0x9000, scoped, tag = 'internal scratch']
  #allocation2 [shape = 'f32[2,18,64]{2,1,0:T(8,128)}', space=vmem, size = 0x6000, scoped, tag = 'scratch operand']
  %s0 = inlined_call_operand.hbm [shape: f32[2,16,64], index: 0, kind: input, shape index: {}]
  %s1 = inlined_call_operand.hbm [shape: f32[3,64,512], index: 1, kind: input, shape index: {}]
  %s2 = inlined_call_operand.hbm [shape: f32[1,512], index: 2, kind: input, shape index: {}]
  %s3 = inlined_call_operand.hbm [shape: f32[2,16,512], index: 3, kind: output, shape index: {}]
  %s4 = sld [smem:[#allocation0]]
  $region34: #{tpu_custom_call.1} parent=0
    _
  %s6 = ssub.s32 1, %s4
  %s7 = scalar_select 0, %s6, %s4
  $region1: #{tpu_custom_call.1} parent=0
    #allocation3 [shape = 'u8[16384]{0}', space=vmem, size = 0x4000, scoped, tag = 'input window, operand 0, single buffered']
    #allocation4 [shape = 's32[1]{0}', space=sflag, size = 0x4, scoped, tag = 'scoped memory for tpu_custom_call.1']
    #allocation5 [shape = 's32[1]{0}', space=sflag, size = 0x4, scoped, tag = 'scoped memory for tpu_custom_call.1']
    #allocation6 [shape = 'u8[393216]{0}', space=vmem, size = 0x60000, scoped, tag = 'input window, operand 1, single buffered']
    #allocation7 [shape = 's32[1]{0}', space=sflag, size = 0x4, scoped, tag = 'scoped memory for tpu_custom_call.1']
    #allocation8 [shape = 'u8[2048]{0}', space=vmem, size = 0x800, scoped, tag = 'input window, operand 2, single buffered']
    #allocation9 [shape = 'u8[65536]{0}', space=vmem, size = 0x10000, scoped, tag = 'output window, operand 0, single buffered']
    %8 = vsyncpa [#allocation4], 0
    %9 = vsyncpa [#allocation7], 0
    %10 = vsyncpa [#allocation5], 0
    // Predicated region
    $region2: #{tpu_custom_call.1} parent=1 // pred_check
      _
    $region3: #{tpu_custom_call.1} parent=1 // pred_check_branch
      %12 = sbr.rel (0) target = $region5
    $region4: #{tpu_custom_call.1} parent=1 // pred_region
      %14 = vsyncadd [#allocation4], 0
      %s15 = sshll.u32 %s0, 4
      %s16 = int_to_ptr.hbm [resolvable:$true] %s15
      %s17 = sshll.u32 [#allocation3], 4
      %s18 = int_to_ptr.vmem [resolvable:$true] %s17
      %23 = dma.hbm_to_vmem [thread:$0]  %s16, 512, %s18, [#allocation4], 128, 128, 8
    $region5: #{tpu_custom_call.1} parent=1 // pred_fallthru
      _
    // Predicated region
    $region6: #{tpu_custom_call.1} parent=1 // pred_check
      _
    $region7: #{tpu_custom_call.1} parent=1 // pred_check_branch
      %25 = sbr.rel (0) target = $region9
    $region8: #{tpu_custom_call.1} parent=1 // pred_region
      %27 = vsyncadd [#allocation7], 0
      %s28 = sshll.u32 %s1, 4
      %s29 = int_to_ptr.hbm [resolvable:$true] %s28
      %s30 = sshll.u32 [#allocation6], 4
      %s31 = int_to_ptr.vmem [resolvable:$true] %s30
      %36 = dma.hbm_to_vmem [thread:$0]  %s29, 12288, %s31, [#allocation7], 512, 512, 32
    $region9: #{tpu_custom_call.1} parent=1 // pred_fallthru
      _
    // Predicated region
    $region10: #{tpu_custom_call.1} parent=1 // pred_check
      _
    $region11: #{tpu_custom_call.1} parent=1 // pred_check_branch
      %38 = sbr.rel (0) target = $region13
    $region12: #{tpu_custom_call.1} parent=1 // pred_region
      %40 = vsyncadd [#allocation7], 0
      %s42 = sshll.u32 %s2, 4
      %s43 = int_to_ptr.hbm [resolvable:$true] %s42
      %s44 = sshll.u32 [#allocation8], 4
      %s45 = int_to_ptr.vmem [resolvable:$true] %s44
      %47 = dma.hbm_to_vmem [thread:$0]  %s43, 64, %s45, [#allocation7]
    $region13: #{tpu_custom_call.1} parent=1 // pred_fallthru
      _
    // Predicated region
    $region14: #{tpu_custom_call.1} parent=1 // pred_check
      _
    $region15: #{tpu_custom_call.1} parent=1 // pred_check_branch
      %49 = sbr.rel (0) target = $region17
    $region16: #{tpu_custom_call.1} parent=1 // pred_region
      %51 = dma.done [#allocation4], 512
    $region17: #{tpu_custom_call.1} parent=1 // pred_fallthru
      _
    // Predicated region
    $region18: #{tpu_custom_call.1} parent=1 // pred_check
      _
    $region19: #{tpu_custom_call.1} parent=1 // pred_check_branch
      %53 = sbr.rel (0) target = $region21
    $region20: #{tpu_custom_call.1} parent=1 // pred_region
      %55 = dma.done [#allocation7], 12288
    $region21: #{tpu_custom_call.1} parent=1 // pred_fallthru
      _
    // Predicated region
    $region22: #{tpu_custom_call.1} parent=1 // pred_check
      _
    $region23: #{tpu_custom_call.1} parent=1 // pred_check_branch
      %57 = sbr.rel (0) target = $region25
    $region24: #{tpu_custom_call.1} parent=1 // pred_region
      %59 = dma.done [#allocation7], 64
    $region25: #{tpu_custom_call.1} parent=1 // pred_fallthru
      _
    %vm60 = vcmask 523264
    %61 = vst.msk [vmem:[#allocation2] sm:$0xff] %vm60, 0.0
    %62 = vst.msk [vmem:[#allocation2 + $0x8] sm:$0xff] %vm60, 0.0
    %vm63 = vcmask 517120
    %64 = vst.msk [vmem:[#allocation2 + $0x10] sm:$0x3] %vm63, 0.0
    %65 = vst.msk [vmem:[#allocation2 + $0x18] sm:$0xff] %vm60, 0.0
    %66 = vst.msk [vmem:[#allocation2 + $0x20] sm:$0xff] %vm60, 0.0
    %67 = vst.msk [vmem:[#allocation2 + $0x28] sm:$0x3] %vm63, 0.0
    %v68 = vld [vmem:[#allocation3] sm:$0xff]
    %v69 = vld [vmem:[#allocation3 + $0x8] sm:$0xff]
    %v70 = vld [vmem:[#allocation3 + $0x10] sm:$0xff]
    %v71 = vld [vmem:[#allocation3 + $0x18] sm:$0xff]
    %72 = vst.msk [vmem:[#allocation2 + $0x1] sm:$0xff] %vm60, %v68
    %73 = vst.msk [vmem:[#allocation2 + $0x9] sm:$0xff] %vm60, %v69
    %74 = vst.msk [vmem:[#allocation2 + $0x19] sm:$0xff] %vm60, %v70
    %75 = vst.msk [vmem:[#allocation2 + $0x21] sm:$0xff] %vm60, %v71
    %v76 = vld [vmem:[#allocation2] sm:$0xff]
    %v77 = vld [vmem:[#allocation2 + $0x8] sm:$0xff]
    %v78 = vld [vmem:[#allocation2 + $0x18] sm:$0xff]
    %v79 = vld [vmem:[#allocation2 + $0x20] sm:$0xff]
    %v80 = vld [vmem:[#allocation6] sm:$0xff]
    %v81 = vld [vmem:[#allocation6 + $0x8] sm:$0xff]
    %v82 = vld [vmem:[#allocation6 + $0x10] sm:$0xff]
    %v83 = vld [vmem:[#allocation6 + $0x18] sm:$0xff]
    %v84 = vld [vmem:[#allocation6 + $0x20] sm:$0xff]
    %v85 = vld [vmem:[#allocation6 + $0x28] sm:$0xff]
    %v86 = vld [vmem:[#allocation6 + $0x30] sm:$0xff]
    %v87 = vld [vmem:[#allocation6 + $0x38] sm:$0xff]
    %v88 = vld [vmem:[#allocation6 + $0x40] sm:$0xff]
    %v89 = vld [vmem:[#allocation6 + $0x48] sm:$0xff]
    %v90 = vld [vmem:[#allocation6 + $0x50] sm:$0xff]
    %v91 = vld [vmem:[#allocation6 + $0x58] sm:$0xff]
    %v92 = vld [vmem:[#allocation6 + $0x60] sm:$0xff]
    %v93 = vld [vmem:[#allocation6 + $0x68] sm:$0xff]
    %v94 = vld [vmem:[#allocation6 + $0x70] sm:$0xff]
    %v95 = vld [vmem:[#allocation6 + $0x78] sm:$0xff]
    %v96 = vld [vmem:[#allocation6 + $0x80] sm:$0xff]
    %v97 = vld [vmem:[#allocation6 + $0x88] sm:$0xff]
    %v98 = vld [vmem:[#allocation6 + $0x90] sm:$0xff]
    %v99 = vld [vmem:[#allocation6 + $0x98] sm:$0xff]
    %v100 = vld [vmem:[#allocation6 + $0xa0] sm:$0xff]
    %v101 = vld [vmem:[#allocation6 + $0xa8] sm:$0xff]
    %v102 = vld [vmem:[#allocation6 + $0xb0] sm:$0xff]
    %v103 = vld [vmem:[#allocation6 + $0xb8] sm:$0xff]
    %v104 = vld [vmem:[#allocation6 + $0xc0] sm:$0xff]
    %v105 = vld [vmem:[#allocation6 + $0xc8] sm:$0xff]
    %v106 = vld [vmem:[#allocation6 + $0xd0] sm:$0xff]
    %v107 = vld [vmem:[#allocation6 + $0xd8] sm:$0xff]
    %v108 = vld [vmem:[#allocation6 + $0xe0] sm:$0xff]
    %v109 = vld [vmem:[#allocation6 + $0xe8] sm:$0xff]
    %v110 = vld [vmem:[#allocation6 + $0xf0] sm:$0xff]
    %v111 = vld [vmem:[#allocation6 + $0xf8] sm:$0xff]
    %v112 = vld [vmem:[#allocation2 + $0x1] sm:$0xff]
    %v113 = vld [vmem:[#allocation2 + $0x9] sm:$0xff]
    %v114 = vld [vmem:[#allocation2 + $0x19] sm:$0xff]
    %v115 = vld [vmem:[#allocation2 + $0x21] sm:$0xff]
    %s116 = scalar_lea.vmem [#allocation6], 256
    %v117 = vld [vmem:[%s116] sm:$0xff]
    %v118 = vld [vmem:[%s116 + $0x8] sm:$0xff]
    %v119 = vld [vmem:[%s116 + $0x10] sm:$0xff]
    %v120 = vld [vmem:[%s116 + $0x18] sm:$0xff]
    %v121 = vld [vmem:[%s116 + $0x20] sm:$0xff]
    %v122 = vld [vmem:[%s116 + $0x28] sm:$0xff]
    %v123 = vld [vmem:[%s116 + $0x30] sm:$0xff]
    %v124 = vld [vmem:[%s116 + $0x38] sm:$0xff]
    %v125 = vld [vmem:[%s116 + $0x40] sm:$0xff]
    %v126 = vld [vmem:[%s116 + $0x48] sm:$0xff]
    %v127 = vld [vmem:[%s116 + $0x50] sm:$0xff]
    %v128 = vld [vmem:[%s116 + $0x58] sm:$0xff]
    %v129 = vld [vmem:[%s116 + $0x60] sm:$0xff]
    %v130 = vld [vmem:[%s116 + $0x68] sm:$0xff]
    %v131 = vld [vmem:[%s116 + $0x70] sm:$0xff]
    %v132 = vld [vmem:[%s116 + $0x78] sm:$0xff]
    %v133 = vld [vmem:[%s116 + $0x80] sm:$0xff]
    %v134 = vld [vmem:[%s116 + $0x88] sm:$0xff]
    %v135 = vld [vmem:[%s116 + $0x90] sm:$0xff]
    %v136 = vld [vmem:[%s116 + $0x98] sm:$0xff]
    %v137 = vld [vmem:[%s116 + $0xa0] sm:$0xff]
    %v138 = vld [vmem:[%s116 + $0xa8] sm:$0xff]
    %v139 = vld [vmem:[%s116 + $0xb0] sm:$0xff]
    %v140 = vld [vmem:[%s116 + $0xb8] sm:$0xff]
    %v141 = vld [vmem:[%s116 + $0xc0] sm:$0xff]
    %v142 = vld [vmem:[%s116 + $0xc8] sm:$0xff]
    %v143 = vld [vmem:[%s116 + $0xd0] sm:$0xff]
    %v144 = vld [vmem:[%s116 + $0xd8] sm:$0xff]
    %v145 = vld [vmem:[%s116 + $0xe0] sm:$0xff]
    %v146 = vld [vmem:[%s116 + $0xe8] sm:$0xff]
    %v147 = vld [vmem:[%s116 + $0xf0] sm:$0xff]
    %v148 = vld [vmem:[%s116 + $0xf8] sm:$0xff]
    %v150 = vsel %vm60, %v112, 0
    %v153 = vsel %vm60, %v113, 0
    %v156 = vsel %vm60, %v114, 0
    %v159 = vsel %vm60, %v115, 0
    %161 = vmatpush.msra.mxu0 0.0
    %162 = vmatpush.msra.mxu0 0.0
    %163 = vmatpush.msra.mxu0 0.0
    %164 = vmatpush.msra.mxu0 0.0
    %165 = vmatpush.msra.mxu0 0.0
    %166 = vmatpush.msra.mxu0 0.0
    %167 = vmatpush.msra.mxu0 0.0
    %168 = vmatpush.msra.mxu0 0.0
    %169 = vmatpush.msra.mxu0 %v145
    %170 = vmatpush.msra.mxu0 %v141
    %171 = vmatpush.msra.mxu0 %v137
    %172 = vmatpush.msra.mxu0 %v133
    %173 = vmatpush.msra.mxu0 %v129
    %174 = vmatpush.msra.mxu0 %v125
    %175 = vmatpush.msra.mxu0 %v121
    %176 = vmatpush.msra.mxu0 %v117
    %177 = vmatmul.f32.gmra.mxu0 %v150
    %v178 = vpop.f32.mrf.mxu0
    %v179 = vadd.f32 0.0, %v178
    %180 = vmatmul.f32.gmra.mxu0 %v153
    %v181 = vpop.f32.mrf.mxu0
    %v182 = vadd.f32 0.0, %v181
    %183 = vmatmul.f32.gmra.mxu0 %v156
    %v184 = vpop.f32.mrf.mxu0
    %v185 = vadd.f32 0.0, %v184
    %186 = vmatmul.f32.gmra.mxu0 %v159
    %v187 = vpop.f32.mrf.mxu0
    %v188 = vadd.f32 0.0, %v187
    %189 = vdwg.mxu0
    %190 = vmatpush.msra.mxu0 0.0
    %191 = vmatpush.msra.mxu0 0.0
    %192 = vmatpush.msra.mxu0 0.0
    %193 = vmatpush.msra.mxu0 0.0
    %194 = vmatpush.msra.mxu0 0.0
    %195 = vmatpush.msra.mxu0 0.0
    %196 = vmatpush.msra.mxu0 0.0
    %197 = vmatpush.msra.mxu0 0.0
    %198 = vmatpush.msra.mxu0 %v146
    %199 = vmatpush.msra.mxu0 %v142
    %200 = vmatpush.msra.mxu0 %v138
    %201 = vmatpush.msra.mxu0 %v134
    %202 = vmatpush.msra.mxu0 %v130
    %203 = vmatpush.msra.mxu0 %v126
    %204 = vmatpush.msra.mxu0 %v122
    %205 = vmatpush.msra.mxu0 %v118
    %206 = vmatmul.f32.gmra.mxu0 %v150
    %v207 = vpop.f32.mrf.mxu0
    %v208 = vadd.f32 0.0, %v207
    %209 = vmatmul.f32.gmra.mxu0 %v153
    %v210 = vpop.f32.mrf.mxu0
    %v211 = vadd.f32 0.0, %v210
    %212 = vmatmul.f32.gmra.mxu0 %v156
    %v213 = vpop.f32.mrf.mxu0
    %v214 = vadd.f32 0.0, %v213
    %215 = vmatmul.f32.gmra.mxu0 %v159
    %v216 = vpop.f32.mrf.mxu0
    %v217 = vadd.f32 0.0, %v216
    %218 = vdwg.mxu0
    %219 = vmatpush.msra.mxu0 0.0
    %220 = vmatpush.msra.mxu0 0.0
    %221 = vmatpush.msra.mxu0 0.0
    %222 = vmatpush.msra.mxu0 0.0
    %223 = vmatpush.msra.mxu0 0.0
    %224 = vmatpush.msra.mxu0 0.0
    %225 = vmatpush.msra.mxu0 0.0
    %226 = vmatpush.msra.mxu0 0.0
    %227 = vmatpush.msra.mxu0 %v147
    %228 = vmatpush.msra.mxu0 %v143
    %229 = vmatpush.msra.mxu0 %v139
    %230 = vmatpush.msra.mxu0 %v135
    %231 = vmatpush.msra.mxu0 %v131
    %232 = vmatpush.msra.mxu0 %v127
    %233 = vmatpush.msra.mxu0 %v123
    %234 = vmatpush.msra.mxu0 %v119
    %235 = vmatmul.f32.gmra.mxu0 %v150
    %v236 = vpop.f32.mrf.mxu0
    %v237 = vadd.f32 0.0, %v236
    %238 = vmatmul.f32.gmra.mxu0 %v153
    %v239 = vpop.f32.mrf.mxu0
    %v240 = vadd.f32 0.0, %v239
    %241 = vmatmul.f32.gmra.mxu0 %v156
    %v242 = vpop.f32.mrf.mxu0
    %v243 = vadd.f32 0.0, %v242
    %244 = vmatmul.f32.gmra.mxu0 %v159
    %v245 = vpop.f32.mrf.mxu0
    %v246 = vadd.f32 0.0, %v245
    %247 = vdwg.mxu0
    %248 = vmatpush.msra.mxu0 0.0
    %249 = vmatpush.msra.mxu0 0.0
    %250 = vmatpush.msra.mxu0 0.0
    %251 = vmatpush.msra.mxu0 0.0
    %252 = vmatpush.msra.mxu0 0.0
    %253 = vmatpush.msra.mxu0 0.0
    %254 = vmatpush.msra.mxu0 0.0
    %255 = vmatpush.msra.mxu0 0.0
    %256 = vmatpush.msra.mxu0 %v148
    %257 = vmatpush.msra.mxu0 %v144
    %258 = vmatpush.msra.mxu0 %v140
    %259 = vmatpush.msra.mxu0 %v136
    %260 = vmatpush.msra.mxu0 %v132
    %261 = vmatpush.msra.mxu0 %v128
    %262 = vmatpush.msra.mxu0 %v124
    %263 = vmatpush.msra.mxu0 %v120
    %264 = vmatmul.f32.gmra.mxu0 %v150
    %v265 = vpop.f32.mrf.mxu0
    %v266 = vadd.f32 0.0, %v265
    %267 = vmatmul.f32.gmra.mxu0 %v153
    %v268 = vpop.f32.mrf.mxu0
    %v269 = vadd.f32 0.0, %v268
    %270 = vmatmul.f32.gmra.mxu0 %v156
    %v271 = vpop.f32.mrf.mxu0
    %v272 = vadd.f32 0.0, %v271
    %273 = vmatmul.f32.gmra.mxu0 %v159
    %v274 = vpop.f32.mrf.mxu0
    %v275 = vadd.f32 0.0, %v274
    %276 = vdwg.mxu0
    %v278 = vsel %vm60, %v76, 0
    %v281 = vsel %vm60, %v77, 0
    %v284 = vsel %vm60, %v78, 0
    %v287 = vsel %vm60, %v79, 0
    %289 = vmatpush.msra.mxu0 0.0
    %290 = vmatpush.msra.mxu0 0.0
    %291 = vmatpush.msra.mxu0 0.0
    %292 = vmatpush.msra.mxu0 0.0
    %293 = vmatpush.msra.mxu0 0.0
    %294 = vmatpush.msra.mxu0 0.0
    %295 = vmatpush.msra.mxu0 0.0
    %296 = vmatpush.msra.mxu0 0.0
    %297 = vmatpush.msra.mxu0 %v108
    %298 = vmatpush.msra.mxu0 %v104
    %299 = vmatpush.msra.mxu0 %v100
    %300 = vmatpush.msra.mxu0 %v96
    %301 = vmatpush.msra.mxu0 %v92
    %302 = vmatpush.msra.mxu0 %v88
    %303 = vmatpush.msra.mxu0 %v84
    %304 = vmatpush.msra.mxu0 %v80
    %305 = vmatmul.f32.gmra.mxu0 %v278
    %v306 = vpop.f32.mrf.mxu0
    %v307 = vadd.f32 %v179, %v306
    %308 = vmatmul.f32.gmra.mxu0 %v281
    %v309 = vpop.f32.mrf.mxu0
    %v310 = vadd.f32 %v182, %v309
    %311 = vmatmul.f32.gmra.mxu0 %v284
    %v312 = vpop.f32.mrf.mxu0
    %v313 = vadd.f32 %v185, %v312
    %314 = vmatmul.f32.gmra.mxu0 %v287
    %v315 = vpop.f32.mrf.mxu0
    %v316 = vadd.f32 %v188, %v315
    %317 = vdwg.mxu0
    %318 = vmatpush.msra.mxu0 0.0
    %319 = vmatpush.msra.mxu0 0.0
    %320 = vmatpush.msra.mxu0 0.0
    %321 = vmatpush.msra.mxu0 0.0
    %322 = vmatpush.msra.mxu0 0.0
    %323 = vmatpush.msra.mxu0 0.0
    %324 = vmatpush.msra.mxu0 0.0
    %325 = vmatpush.msra.mxu0 0.0
    %326 = vmatpush.msra.mxu0 %v109
    %327 = vmatpush.msra.mxu0 %v105
    %328 = vmatpush.msra.mxu0 %v101
    %329 = vmatpush.msra.mxu0 %v97
    %330 = vmatpush.msra.mxu0 %v93
    %331 = vmatpush.msra.mxu0 %v89
    %332 = vmatpush.msra.mxu0 %v85
    %333 = vmatpush.msra.mxu0 %v81
    %334 = vmatmul.f32.gmra.mxu0 %v278
    %v335 = vpop.f32.mrf.mxu0
    %v336 = vadd.f32 %v208, %v335
    %337 = vmatmul.f32.gmra.mxu0 %v281
    %v338 = vpop.f32.mrf.mxu0
    %v339 = vadd.f32 %v211, %v338
    %340 = vmatmul.f32.gmra.mxu0 %v284
    %v341 = vpop.f32.mrf.mxu0
    %v342 = vadd.f32 %v214, %v341
    %343 = vmatmul.f32.gmra.mxu0 %v287
    %v344 = vpop.f32.mrf.mxu0
    %v345 = vadd.f32 %v217, %v344
    %346 = vdwg.mxu0
    %347 = vmatpush.msra.mxu0 0.0
    %348 = vmatpush.msra.mxu0 0.0
    %349 = vmatpush.msra.mxu0 0.0
    %350 = vmatpush.msra.mxu0 0.0
    %351 = vmatpush.msra.mxu0 0.0
    %352 = vmatpush.msra.mxu0 0.0
    %353 = vmatpush.msra.mxu0 0.0
    %354 = vmatpush.msra.mxu0 0.0
    %355 = vmatpush.msra.mxu0 %v110
    %356 = vmatpush.msra.mxu0 %v106
    %357 = vmatpush.msra.mxu0 %v102
    %358 = vmatpush.msra.mxu0 %v98
    %359 = vmatpush.msra.mxu0 %v94
    %360 = vmatpush.msra.mxu0 %v90
    %361 = vmatpush.msra.mxu0 %v86
    %362 = vmatpush.msra.mxu0 %v82
    %363 = vmatmul.f32.gmra.mxu0 %v278
    %v364 = vpop.f32.mrf.mxu0
    %v365 = vadd.f32 %v237, %v364
    %366 = vmatmul.f32.gmra.mxu0 %v281
    %v367 = vpop.f32.mrf.mxu0
    %v368 = vadd.f32 %v240, %v367
    %369 = vmatmul.f32.gmra.mxu0 %v284
    %v370 = vpop.f32.mrf.mxu0
    %v371 = vadd.f32 %v243, %v370
    %372 = vmatmul.f32.gmra.mxu0 %v287
    %v373 = vpop.f32.mrf.mxu0
    %v374 = vadd.f32 %v246, %v373
    %375 = vdwg.mxu0
    %376 = vmatpush.msra.mxu0 0.0
    %377 = vmatpush.msra.mxu0 0.0
    %378 = vmatpush.msra.mxu0 0.0
    %379 = vmatpush.msra.mxu0 0.0
    %380 = vmatpush.msra.mxu0 0.0
    %381 = vmatpush.msra.mxu0 0.0
    %382 = vmatpush.msra.mxu0 0.0
    %383 = vmatpush.msra.mxu0 0.0
    %384 = vmatpush.msra.mxu0 %v111
    %385 = vmatpush.msra.mxu0 %v107
    %386 = vmatpush.msra.mxu0 %v103
    %387 = vmatpush.msra.mxu0 %v99
    %388 = vmatpush.msra.mxu0 %v95
    %389 = vmatpush.msra.mxu0 %v91
    %390 = vmatpush.msra.mxu0 %v87
    %391 = vmatpush.msra.mxu0 %v83
    %392 = vmatmul.f32.gmra.mxu0 %v278
    %v393 = vpop.f32.mrf.mxu0
    %v394 = vadd.f32 %v266, %v393
    %395 = vmatmul.f32.gmra.mxu0 %v281
    %v396 = vpop.f32.mrf.mxu0
    %v397 = vadd.f32 %v269, %v396
    %398 = vmatmul.f32.gmra.mxu0 %v284
    %v399 = vpop.f32.mrf.mxu0
    %v400 = vadd.f32 %v272, %v399
    %401 = vmatmul.f32.gmra.mxu0 %v287
    %v402 = vpop.f32.mrf.mxu0
    %v403 = vadd.f32 %v275, %v402
    %404 = vdwg.mxu0
    %v405 = vld [vmem:[#allocation2 + $0x2] sm:$0xff]
    %v406 = vld [vmem:[#allocation2 + $0xa] sm:$0xff]
    %v407 = vld [vmem:[#allocation2 + $0x1a] sm:$0xff]
    %v408 = vld [vmem:[#allocation2 + $0x22] sm:$0xff]
    %s409 = scalar_lea.vmem [#allocation6], 512
    %v410 = vld [vmem:[%s409] sm:$0xff]
    %v411 = vld [vmem:[%s409 + $0x8] sm:$0xff]
    %v412 = vld [vmem:[%s409 + $0x10] sm:$0xff]
    %v413 = vld [vmem:[%s409 + $0x18] sm:$0xff]
    %v414 = vld [vmem:[%s409 + $0x20] sm:$0xff]
    %v415 = vld [vmem:[%s409 + $0x28] sm:$0xff]
    %v416 = vld [vmem:[%s409 + $0x30] sm:$0xff]
    %v417 = vld [vmem:[%s409 + $0x38] sm:$0xff]
    %v418 = vld [vmem:[%s409 + $0x40] sm:$0xff]
    %v419 = vld [vmem:[%s409 + $0x48] sm:$0xff]
    %v420 = vld [vmem:[%s409 + $0x50] sm:$0xff]
    %v421 = vld [vmem:[%s409 + $0x58] sm:$0xff]
    %v422 = vld [vmem:[%s409 + $0x60] sm:$0xff]
    %v423 = vld [vmem:[%s409 + $0x68] sm:$0xff]
    %v424 = vld [vmem:[%s409 + $0x70] sm:$0xff]
    %v425 = vld [vmem:[%s409 + $0x78] sm:$0xff]
    %v426 = vld [vmem:[%s409 + $0x80] sm:$0xff]
    %v427 = vld [vmem:[%s409 + $0x88] sm:$0xff]
    %v428 = vld [vmem:[%s409 + $0x90] sm:$0xff]
    %v429 = vld [vmem:[%s409 + $0x98] sm:$0xff]
    %v430 = vld [vmem:[%s409 + $0xa0] sm:$0xff]
    %v431 = vld [vmem:[%s409 + $0xa8] sm:$0xff]
    %v432 = vld [vmem:[%s409 + $0xb0] sm:$0xff]
    %v433 = vld [vmem:[%s409 + $0xb8] sm:$0xff]
    %v434 = vld [vmem:[%s409 + $0xc0] sm:$0xff]
    %v435 = vld [vmem:[%s409 + $0xc8] sm:$0xff]
    %v436 = vld [vmem:[%s409 + $0xd0] sm:$0xff]
    %v437 = vld [vmem:[%s409 + $0xd8] sm:$0xff]
    %v438 = vld [vmem:[%s409 + $0xe0] sm:$0xff]
    %v439 = vld [vmem:[%s409 + $0xe8] sm:$0xff]
    %v440 = vld [vmem:[%s409 + $0xf0] sm:$0xff]
    %v441 = vld [vmem:[%s409 + $0xf8] sm:$0xff]
    %v443 = vsel %vm60, %v405, 0
    %v446 = vsel %vm60, %v406, 0
    %v449 = vsel %vm60, %v407, 0
    %v452 = vsel %vm60, %v408, 0
    %454 = vmatpush.msra.mxu0 0.0
    %455 = vmatpush.msra.mxu0 0.0
    %456 = vmatpush.msra.mxu0 0.0
    %457 = vmatpush.msra.mxu0 0.0
    %458 = vmatpush.msra.mxu0 0.0
    %459 = vmatpush.msra.mxu0 0.0
    %460 = vmatpush.msra.mxu0 0.0
    %461 = vmatpush.msra.mxu0 0.0
    %462 = vmatpush.msra.mxu0 %v438
    %463 = vmatpush.msra.mxu0 %v434
    %464 = vmatpush.msra.mxu0 %v430
    %465 = vmatpush.msra.mxu0 %v426
    %466 = vmatpush.msra.mxu0 %v422
    %467 = vmatpush.msra.mxu0 %v418
    %468 = vmatpush.msra.mxu0 %v414
    %469 = vmatpush.msra.mxu0 %v410
    %470 = vmatmul.f32.gmra.mxu0 %v443
    %v471 = vpop.f32.mrf.mxu0
    %v472 = vadd.f32 0.0, %v471
    %473 = vmatmul.f32.gmra.mxu0 %v446
    %v474 = vpop.f32.mrf.mxu0
    %v475 = vadd.f32 0.0, %v474
    %476 = vmatmul.f32.gmra.mxu0 %v449
    %v477 = vpop.f32.mrf.mxu0
    %v478 = vadd.f32 0.0, %v477
    %479 = vmatmul.f32.gmra.mxu0 %v452
    %v480 = vpop.f32.mrf.mxu0
    %v481 = vadd.f32 0.0, %v480
    %482 = vdwg.mxu0
    %483 = vmatpush.msra.mxu0 0.0
    %484 = vmatpush.msra.mxu0 0.0
    %485 = vmatpush.msra.mxu0 0.0
    %486 = vmatpush.msra.mxu0 0.0
    %487 = vmatpush.msra.mxu0 0.0
    %488 = vmatpush.msra.mxu0 0.0
    %489 = vmatpush.msra.mxu0 0.0
    %490 = vmatpush.msra.mxu0 0.0
    %491 = vmatpush.msra.mxu0 %v439
    %492 = vmatpush.msra.mxu0 %v435
    %493 = vmatpush.msra.mxu0 %v431
    %494 = vmatpush.msra.mxu0 %v427
    %495 = vmatpush.msra.mxu0 %v423
    %496 = vmatpush.msra.mxu0 %v419
    %497 = vmatpush.msra.mxu0 %v415
    %498 = vmatpush.msra.mxu0 %v411
    %499 = vmatmul.f32.gmra.mxu0 %v443
    %v500 = vpop.f32.mrf.mxu0
    %v501 = vadd.f32 0.0, %v500
    %502 = vmatmul.f32.gmra.mxu0 %v446
    %v503 = vpop.f32.mrf.mxu0
    %v504 = vadd.f32 0.0, %v503
    %505 = vmatmul.f32.gmra.mxu0 %v449
    %v506 = vpop.f32.mrf.mxu0
    %v507 = vadd.f32 0.0, %v506
    %508 = vmatmul.f32.gmra.mxu0 %v452
    %v509 = vpop.f32.mrf.mxu0
    %v510 = vadd.f32 0.0, %v509
    %511 = vdwg.mxu0
    %512 = vmatpush.msra.mxu0 0.0
    %513 = vmatpush.msra.mxu0 0.0
    %514 = vmatpush.msra.mxu0 0.0
    %515 = vmatpush.msra.mxu0 0.0
    %516 = vmatpush.msra.mxu0 0.0
    %517 = vmatpush.msra.mxu0 0.0
    %518 = vmatpush.msra.mxu0 0.0
    %519 = vmatpush.msra.mxu0 0.0
    %520 = vmatpush.msra.mxu0 %v440
    %521 = vmatpush.msra.mxu0 %v436
    %522 = vmatpush.msra.mxu0 %v432
    %523 = vmatpush.msra.mxu0 %v428
    %524 = vmatpush.msra.mxu0 %v424
    %525 = vmatpush.msra.mxu0 %v420
    %526 = vmatpush.msra.mxu0 %v416
    %527 = vmatpush.msra.mxu0 %v412
    %528 = vmatmul.f32.gmra.mxu0 %v443
    %v529 = vpop.f32.mrf.mxu0
    %v530 = vadd.f32 0.0, %v529
    %531 = vmatmul.f32.gmra.mxu0 %v446
    %v532 = vpop.f32.mrf.mxu0
    %v533 = vadd.f32 0.0, %v532
    %534 = vmatmul.f32.gmra.mxu0 %v449
    %v535 = vpop.f32.mrf.mxu0
    %v536 = vadd.f32 0.0, %v535
    %537 = vmatmul.f32.gmra.mxu0 %v452
    %v538 = vpop.f32.mrf.mxu0
    %v539 = vadd.f32 0.0, %v538
    %540 = vdwg.mxu0
    %541 = vmatpush.msra.mxu0 0.0
    %542 = vmatpush.msra.mxu0 0.0
    %543 = vmatpush.msra.mxu0 0.0
    %544 = vmatpush.msra.mxu0 0.0
    %545 = vmatpush.msra.mxu0 0.0
    %546 = vmatpush.msra.mxu0 0.0
    %547 = vmatpush.msra.mxu0 0.0
    %548 = vmatpush.msra.mxu0 0.0
    %549 = vmatpush.msra.mxu0 %v441
    %550 = vmatpush.msra.mxu0 %v437
    %551 = vmatpush.msra.mxu0 %v433
    %552 = vmatpush.msra.mxu0 %v429
    %553 = vmatpush.msra.mxu0 %v425
    %554 = vmatpush.msra.mxu0 %v421
    %555 = vmatpush.msra.mxu0 %v417
    %556 = vmatpush.msra.mxu0 %v413
    %557 = vmatmul.f32.gmra.mxu0 %v443
    %v558 = vpop.f32.mrf.mxu0
    %v559 = vadd.f32 0.0, %v558
    %560 = vmatmul.f32.gmra.mxu0 %v446
    %v561 = vpop.f32.mrf.mxu0
    %v562 = vadd.f32 0.0, %v561
    %563 = vmatmul.f32.gmra.mxu0 %v449
    %v564 = vpop.f32.mrf.mxu0
    %v565 = vadd.f32 0.0, %v564
    %566 = vmatmul.f32.gmra.mxu0 %v452
    %v567 = vpop.f32.mrf.mxu0
    %v568 = vadd.f32 0.0, %v567
    %569 = vdwg.mxu0
    %v570 = vadd.f32 %v307, %v472
    %v571 = vadd.f32 %v336, %v501
    %v572 = vadd.f32 %v365, %v530
    %v573 = vadd.f32 %v394, %v559
    %v574 = vadd.f32 %v310, %v475
    %v575 = vadd.f32 %v339, %v504
    %v576 = vadd.f32 %v368, %v533
    %v577 = vadd.f32 %v397, %v562
    %v578 = vadd.f32 %v313, %v478
    %v579 = vadd.f32 %v342, %v507
    %v580 = vadd.f32 %v371, %v536
    %v581 = vadd.f32 %v400, %v565
    %v582 = vadd.f32 %v316, %v481
    %v583 = vadd.f32 %v345, %v510
    %v584 = vadd.f32 %v374, %v539
    %v585 = vadd.f32 %v403, %v568
    %v586 = vld [vmem:[#allocation8] sm:$0xf]
    %v588 = vperm.slane %v586, 0
    %v589 = vperm.slane %v586, 1
    %v590 = vperm.slane %v586, 2
    %v591 = vperm.slane %v586, 3
    %v596 = vadd.f32 %v570, %v588
    %v597 = vadd.f32 %v571, %v589
    %v598 = vadd.f32 %v572, %v590
    %v599 = vadd.f32 %v573, %v591
    %v600 = vadd.f32 %v574, %v588
    %v601 = vadd.f32 %v575, %v589
    %v602 = vadd.f32 %v576, %v590
    %v603 = vadd.f32 %v577, %v591
    %v604 = vadd.f32 %v578, %v588
    %v605 = vadd.f32 %v579, %v589
    %v606 = vadd.f32 %v580, %v590
    %v607 = vadd.f32 %v581, %v591
    %v608 = vadd.f32 %v582, %v588
    %v609 = vadd.f32 %v583, %v589
    %v610 = vadd.f32 %v584, %v590
    %v611 = vadd.f32 %v585, %v591
    %612 = vst [vmem:[#allocation9] sm:$0xff] %v596
    %613 = vst [vmem:[#allocation9 + $0x8] sm:$0xff] %v597
    %614 = vst [vmem:[#allocation9 + $0x10] sm:$0xff] %v598
    %615 = vst [vmem:[#allocation9 + $0x18] sm:$0xff] %v599
    %616 = vst [vmem:[#allocation9 + $0x20] sm:$0xff] %v600
    %617 = vst [vmem:[#allocation9 + $0x28] sm:$0xff] %v601
    %618 = vst [vmem:[#allocation9 + $0x30] sm:$0xff] %v602
    %619 = vst [vmem:[#allocation9 + $0x38] sm:$0xff] %v603
    %620 = vst [vmem:[#allocation9 + $0x40] sm:$0xff] %v604
    %621 = vst [vmem:[#allocation9 + $0x48] sm:$0xff] %v605
    %622 = vst [vmem:[#allocation9 + $0x50] sm:$0xff] %v606
    %623 = vst [vmem:[#allocation9 + $0x58] sm:$0xff] %v607
    %624 = vst [vmem:[#allocation9 + $0x60] sm:$0xff] %v608
    %625 = vst [vmem:[#allocation9 + $0x68] sm:$0xff] %v609
    %626 = vst [vmem:[#allocation9 + $0x70] sm:$0xff] %v610
    %627 = vst [vmem:[#allocation9 + $0x78] sm:$0xff] %v611
    // Predicated region
    $region26: #{tpu_custom_call.1} parent=1 // pred_check
      _
    $region27: #{tpu_custom_call.1} parent=1 // pred_check_branch
      %629 = sbr.rel (0) target = $region29
    $region28: #{tpu_custom_call.1} parent=1 // pred_region
      %631 = vsyncadd [#allocation5], 0
      %s632 = sshll.u32 [#allocation9], 4
      %s633 = int_to_ptr.vmem [resolvable:$true] %s632
      %s634 = sshll.u32 %s3, 4
      %s635 = int_to_ptr.hbm [resolvable:$true] %s634
      %640 = dma.vmem_to_hbm [thread:$0]  %s633, 2048, %s635, [#allocation5], 512, 512, 32
    $region29: #{tpu_custom_call.1} parent=1 // pred_fallthru
      _
    // Predicated region
    $region30: #{tpu_custom_call.1} parent=1 // pred_check
      _
    $region31: #{tpu_custom_call.1} parent=1 // pred_check_branch
      %642 = sbr.rel (0) target = $region33
    $region32: #{tpu_custom_call.1} parent=1 // pred_region
      %644 = dma.done [#allocation5], 2048
    $region33: #{tpu_custom_call.1} parent=1 // pred_fallthru
      _
    %645 = vsyncpa [#allocation4], 1
    %646 = vsyncpa [#allocation7], 1
    %647 = vsyncpa [#allocation5], 1

</llo_original>
